<compile_context>
chip_gen: v6e
topology: v6e:2x2x1
jax: 0.10.0
libtpu: 0.0.40
codegen_flags: <defaults>
</compile_context>

<pallas_src>
import jax
import jax.numpy as jnp
from jax.experimental import pallas as pl
from jax.experimental.pallas import tpu as pltpu


def _gate_bias_kernel(x_ref, w_ref, b_ref, o_ref):
    # x_ref: (TM, TL); w_ref, b_ref: (TM, 1) -> broadcast across lanes (VPU).
    o_ref[...] = (x_ref[...] * w_ref[...] + b_ref[...]).astype(o_ref.dtype)


def _gate_kernel(x_ref, w_ref, o_ref):
    o_ref[...] = (x_ref[...] * w_ref[...]).astype(o_ref.dtype)


def _pick_tile(full, quantum, cap):
    """Largest tile <= cap that is either the full extent or a multiple of quantum."""
    if full <= cap:
        return full
    return max((cap // quantum) * quantum, quantum)


def soft_gating(x, weight, bias=None, *, target_tile_bytes=2 * 1024 * 1024):
    """out = weight * x (+ bias); x: (B, C, *spatial), weight/bias: (1, C, 1, ...)."""
    B, C = int(x.shape[0]), int(x.shape[1])
    spatial = x.shape[2:]
    L = 1
    for s in spatial:
        L *= int(s)
    M = B * C

    assert weight.shape == (1, C) + (1,) * len(spatial), weight.shape

    # Lane-dense 2-D view: rows = (batch, channel) pairs, cols = flattened spatial.
    x2 = x.reshape(M, L)
    # Per-row parameters cast to x.dtype (avoids implicit f32 promotion in-kernel).
    w_rows = (
        jnp.broadcast_to(weight.reshape(1, C), (B, C)).reshape(M, 1).astype(x.dtype)
    )

    itemsize = jnp.dtype(x.dtype).itemsize
    TL = _pick_tile(L, 128, 4096)  # lane-dense last dim
    rows_cap = max(int(target_tile_bytes // (TL * itemsize)), 8)
    TM = _pick_tile(M, 8, rows_cap)

    grid = (pl.cdiv(M, TM), pl.cdiv(L, TL))

    x_spec = pl.BlockSpec((TM, TL), lambda i, j: (i, j))
    p_spec = pl.BlockSpec((TM, 1), lambda i, j: (i, 0))  # re-DMA'd only when i changes
    out_spec = pl.BlockSpec((TM, TL), lambda i, j: (i, j))

    compiler_params = pltpu.CompilerParams(
        dimension_semantics=("parallel", "parallel"),
    )

    if bias is not None:
        assert bias.shape == weight.shape, bias.shape
        b_rows = (
            jnp.broadcast_to(bias.reshape(1, C), (B, C)).reshape(M, 1).astype(x.dtype)
        )
        out2 = pl.pallas_call(
            _gate_bias_kernel,
            out_shape=jax.ShapeDtypeStruct((M, L), x.dtype),
            grid_spec=pltpu.PrefetchScalarGridSpec(
                num_scalar_prefetch=0,
                grid=grid,
                in_specs=[x_spec, p_spec, p_spec],
                out_specs=out_spec,
            ),
            compiler_params=compiler_params,
        )(x2, w_rows, b_rows)
    else:
        out2 = pl.pallas_call(
            _gate_kernel,
            out_shape=jax.ShapeDtypeStruct((M, L), x.dtype),
            grid_spec=pltpu.PrefetchScalarGridSpec(
                num_scalar_prefetch=0,
                grid=grid,
                in_specs=[x_spec, p_spec],
                out_specs=out_spec,
            ),
            compiler_params=compiler_params,
        )(x2, w_rows)

    return out2.reshape(x.shape)


class SoftGatingPallas:
    """Mirror of the PyTorch SoftGating module."""

    def __init__(self, in_features, out_features=None, n_dim=2, bias=False):
        if out_features is not None and in_features != out_features:
            raise ValueError(
                f"Got in_features={in_features} and out_features={out_features}, "
                "but these two must be the same for soft-gating"
            )
        self.in_features = in_features
        self.out_features = out_features
        self.n_dim = n_dim
        # Deterministic init matching torch.ones(1, C, *(1,)*n_dim)
        self.weight = jnp.ones((1, in_features) + (1,) * n_dim, dtype=jnp.float32)
        self.bias = (
            jnp.ones((1, in_features) + (1,) * n_dim, dtype=jnp.float32)
            if bias
            else None
        )

    def __call__(self, x):
        return soft_gating(x, self.weight, self.bias)


if __name__ == "__main__":
    key = jax.random.PRNGKey(0)
    B, C, H, W = 2, 4, 16, 16
    kx, kw, kb = jax.random.split(key, 3)
    x = jax.random.normal(kx, (B, C, H, W), dtype=jnp.float32)

    # bias=False path (module default; torch init is all-ones weight)
    module = SoftGatingPallas(in_features=C, n_dim=2, bias=False)
    out = jax.block_until_ready(module(x))
    ref = module.weight * x
    assert jnp.allclose(out, ref, atol=1e-6), "bias=False mismatch"

    # bias=True path
    module_b = SoftGatingPallas(in_features=C, n_dim=2, bias=True)
    out_b = jax.block_until_ready(module_b(x))
    ref_b = module_b.weight * x + module_b.bias
    assert jnp.allclose(out_b, ref_b, atol=1e-6), "bias=True mismatch"

    # Non-trivial per-channel weight/bias to exercise the broadcast path
    w = jax.random.normal(kw, (1, C, 1, 1), dtype=jnp.float32)
    b = jax.random.normal(kb, (1, C, 1, 1), dtype=jnp.float32)
    out_r = jax.block_until_ready(soft_gating(x, w, b))
    ref_r = w * x + b
    assert jnp.allclose(out_r, ref_r, atol=1e-6, rtol=1e-6), "random params mismatch"

    print("KERNEL_OK")
</pallas_src>

<mosaic_0001>
module attributes {stable_mosaic.version = 11 : i64} {
  func.func @_gate_kernel(%arg0: i32, %arg1: i32, %arg2: memref<8x256xf32, #tpu.memory_space<vmem>>, %arg3: memref<8x1xf32, #tpu.memory_space<vmem>>, %arg4: memref<8x256xf32, #tpu.memory_space<vmem>>) attributes {dimension_semantics = [#tpu.dimension_semantics<parallel>, #tpu.dimension_semantics<parallel>], iteration_bounds = array<i64: 1, 1>, scalar_prefetch = 0 : i64, scratch_operands = 0 : i64, tpu.core_type = #tpu.core_type<tc>, window_params = [{transform_indices = @transform_0, window_bounds = array<i64: 8, 256>}, {transform_indices = @transform_1, window_bounds = array<i64: 8, 1>}, {transform_indices = @transform_2, window_bounds = array<i64: 8, 256>}]} {
    %c0 = arith.constant 0 : index
    %c0_0 = arith.constant 0 : index
    %0 = vector.load %arg2[%c0, %c0_0] : memref<8x256xf32, #tpu.memory_space<vmem>>, vector<8x256xf32>
    %c0_1 = arith.constant 0 : index
    %c0_2 = arith.constant 0 : index
    %1 = vector.load %arg3[%c0_1, %c0_2] : memref<8x1xf32, #tpu.memory_space<vmem>>, vector<8x1xf32>
    %2 = vector.broadcast %1 : vector<8x1xf32> to vector<8x256xf32>
    %3 = arith.mulf %0, %2 : vector<8x256xf32>
    %c0_3 = arith.constant 0 : index
    %c0_4 = arith.constant 0 : index
    %4 = vector.load %arg4[%c0_3, %c0_4] : memref<8x256xf32, #tpu.memory_space<vmem>>, vector<8x256xf32>
    tpu.vector_store %arg4[%c0_3, %c0_4], %3 {strides = array<i32>} : memref<8x256xf32, #tpu.memory_space<vmem>>, vector<8x256xf32>,
    return
  }
  func.func @transform_0(%arg0: i32, %arg1: i32) -> (i32, i32) {
    %c0_i32 = arith.constant 0 : i32
    return %arg0, %arg1 : i32, i32
  }
  func.func @transform_1(%arg0: i32, %arg1: i32) -> (i32, i32) {
    %c0_i32 = arith.constant 0 : i32
    %c0_i32_0 = arith.constant 0 : i32
    return %arg0, %c0_i32 : i32, i32
  }
  func.func @transform_2(%arg0: i32, %arg1: i32) -> (i32, i32) {
    %c0_i32 = arith.constant 0 : i32
    return %arg0, %arg1 : i32, i32
  }
}

</mosaic_0001>

<llo_original>
// kernel: tpu_custom_call.1
$region0: #{tpu_custom_call.1}
  #allocation0 [shape = 'u32[]', space=smem, size = 0x4, offset = 0x4, fixed_abs, tag = 'smem constant byte address 0x4 - core index']
  #allocation1 [shape = 'u32[144,128]{1,0:T(1,128)}', space=vmem, size = 0x12000, scoped, tag = 'internal scratch']
  %s0 = inlined_call_operand.hbm [shape: f32[8,256], index: 0, kind: input, shape index: {}]
  %s1 = inlined_call_operand.vmem [shape: f32[8,1], index: 1, kind: input, shape index: {}]
  %s2 = inlined_call_operand.hbm [shape: f32[8,256], index: 2, kind: output, shape index: {}]
  %s3 = sld [smem:[#allocation0]]
  $region22: #{tpu_custom_call.1} parent=0
    _
  %s5 = ssub.s32 1, %s3
  %s6 = scalar_select 0, %s5, %s3
  $region1: #{tpu_custom_call.1} parent=0
    #allocation2 [shape = 'u8[8192]{0}', space=vmem, size = 0x2000, scoped, tag = 'input window, operand 0, single buffered']
    #allocation3 [shape = 's32[1]{0}', space=sflag, size = 0x4, scoped, tag = 'scoped memory for tpu_custom_call.1']
    #allocation4 [shape = 's32[1]{0}', space=sflag, size = 0x4, scoped, tag = 'scoped memory for tpu_custom_call.1']
    #allocation5 [shape = 'u8[8192]{0}', space=vmem, size = 0x2000, scoped, tag = 'output window, operand 0, single buffered']
    %7 = vsyncpa [#allocation3], 0
    %8 = vsyncpa [#allocation4], 0
    // Predicated region
    $region2: #{tpu_custom_call.1} parent=1 // pred_check
      _
    $region3: #{tpu_custom_call.1} parent=1 // pred_check_branch
      %10 = sbr.rel (0) target = $region5
    $region4: #{tpu_custom_call.1} parent=1 // pred_region
      %s12 = ssub.s32 256, 256
      %13 = vsyncadd [#allocation3], %s12
      %s15 = sshll.u32 [#allocation2], 4
      %s16 = int_to_ptr.vmem [resolvable:$true] %s15
      %18 = dma.hbm_to_vmem [thread:$0]  %s0, 256, %s16, [#allocation3]
    $region5: #{tpu_custom_call.1} parent=1 // pred_fallthru
      _
    // Predicated region
    $region6: #{tpu_custom_call.1} parent=1 // pred_check
      _
    $region7: #{tpu_custom_call.1} parent=1 // pred_check_branch
      %20 = sbr.rel (0) target = $region9
    $region8: #{tpu_custom_call.1} parent=1 // pred_region
      _
    $region9: #{tpu_custom_call.1} parent=1 // pred_fallthru
      _
    // Predicated region
    $region10: #{tpu_custom_call.1} parent=1 // pred_check
      _
    $region11: #{tpu_custom_call.1} parent=1 // pred_check_branch
      %22 = sbr.rel (0) target = $region13
    $region12: #{tpu_custom_call.1} parent=1 // pred_region
      %23 = dma.done [#allocation3], 256
    $region13: #{tpu_custom_call.1} parent=1 // pred_fallthru
      _
    %v24 = vld [vmem:[#allocation2] sm:$0xff]
    %v25 = vld [vmem:[#allocation2 + $0x8] sm:$0xff]
    %v26 = vld [vmem:[%s1] sm:$0xff]
    %28 = vset.pattern.permute.xlu0 0
    %29 = vperm.xlu0 %28, %v26
    %v30 = vpop.permute.xlu0 %29
    %v32 = vmul.f32 %v24, %v30
    %v33 = vmul.f32 %v25, %v30
    %34 = vst [vmem:[#allocation5] sm:$0xff] %v32
    %35 = vst [vmem:[#allocation5 + $0x8] sm:$0xff] %v33
    // Predicated region
    $region14: #{tpu_custom_call.1} parent=1 // pred_check
      _
    $region15: #{tpu_custom_call.1} parent=1 // pred_check_branch
      %37 = sbr.rel (0) target = $region17
    $region16: #{tpu_custom_call.1} parent=1 // pred_region
      %s39 = ssub.s32 256, 256
      %40 = vsyncadd [#allocation4], %s39
      %s42 = sshll.u32 [#allocation5], 4
      %s43 = int_to_ptr.vmem [resolvable:$true] %s42
      %45 = dma.vmem_to_hbm [thread:$0]  %s43, 256, %s2, [#allocation4]
    $region17: #{tpu_custom_call.1} parent=1 // pred_fallthru
      _
    // Predicated region
    $region18: #{tpu_custom_call.1} parent=1 // pred_check
      _
    $region19: #{tpu_custom_call.1} parent=1 // pred_check_branch
      %47 = sbr.rel (0) target = $region21
    $region20: #{tpu_custom_call.1} parent=1 // pred_region
      %48 = dma.done [#allocation4], 256
    $region21: #{tpu_custom_call.1} parent=1 // pred_fallthru
      _
    %49 = vsyncpa [#allocation3], 1
    %50 = vsyncpa [#allocation4], 1

</llo_original>
